<compile_context>
chip_gen: v6e
topology: v6e:2x2x1
jax: 0.10.0
libtpu: 0.0.40
codegen_flags: <defaults>
</compile_context>

<pallas_src>
import functools

import jax
import jax.numpy as jnp
from jax.experimental import pallas as pl
from jax.experimental.pallas import tpu as pltpu


def _round_up(x, m):
    return ((x + m - 1) // m) * m


# -----------------------------------------------------------------------------
# Fused kernel.
#   w_ref : (OC_pad, K_pad)  bf16  conv weights (resident, tiny)
#   x_ref : (K_pad, tm)      bf16  im2col(x)^T row-tile (streamed over grid)
#   g_ref : (OC_pad, 1)      f32   gamma
#   b_ref : (OC_pad, 1)      f32   beta
#   z_ref : (T, OC_pad, tm)  f32   FULL output, VMEM-resident across the grid
#   s_sum_ref / s_css_ref : (OC_pad, 128) f32 per-lane-bucket stat scratch
# -----------------------------------------------------------------------------
def _fused_conv_bn_leaky_kernel(w_ref, x_ref, g_ref, b_ref, z_ref,
                                s_sum_ref, s_css_ref,
                                *, tm, num_tiles, m_true, eps, slope):
    i = pl.program_id(0)
    oc_pad = z_ref.shape[1]

    @pl.when(i == 0)
    def _init():
        s_sum_ref[...] = jnp.zeros_like(s_sum_ref)

    # Conv tile on the MXU: (OC_pad, K_pad) x (K_pad, tm) -> f32 (OC_pad, tm).
    acc = jnp.dot(w_ref[...], x_ref[...], preferred_element_type=jnp.float32)
    z_ref[i] = acc                      # stash raw conv output (VMEM resident)

    # Per-lane-bucket partial sums.  Padded M columns are exactly zero so they
    # contribute nothing; the cross-lane reduce is deferred to the finalize.
    for c in range(tm // 128):
        s_sum_ref[...] += acc[:, c * 128:(c + 1) * 128]

    @pl.when(i == num_tiles - 1)
    def _finalize():
        inv_m = 1.0 / float(m_true)
        mean = jnp.sum(s_sum_ref[...], axis=1, keepdims=True) * inv_m  # (OC_pad,1)

        # Numerically stable two-pass variance over the VMEM-resident y.
        s_css_ref[...] = jnp.zeros_like(s_css_ref)
        lane = jax.lax.broadcasted_iota(jnp.int32, (oc_pad, tm), 1)

        @pl.loop(0, num_tiles)
        def _var_pass(j):
            y = z_ref[j]                                   # (OC_pad, tm)
            d = jnp.where(lane + j * tm < m_true, y - mean, 0.0)
            for c in range(tm // 128):
                blk = d[:, c * 128:(c + 1) * 128]
                s_css_ref[...] += blk * blk

        var = jnp.sum(s_css_ref[...], axis=1, keepdims=True) * inv_m   # biased
        inv_std = jax.lax.rsqrt(var + eps)
        scale = g_ref[...] * inv_std                                   # (OC_pad,1)
        shift = b_ref[...] - mean * scale

        # Normalize + LeakyReLU in place; single HBM write happens afterwards.
        @pl.loop(0, num_tiles)
        def _norm_pass(j):
            zz = z_ref[j] * scale + shift
            z_ref[j] = jnp.where(zz >= 0, zz, slope * zz)


# -----------------------------------------------------------------------------
# im2col, emitted directly transposed + padded:  (K_pad, M_pad) bf16.
#   rows    = features ordered (c, kh, kw)  (matches W.reshape(OC, C*KH*KW))
#   columns = output positions ordered (n, oh, ow)
# -----------------------------------------------------------------------------
def _im2col_T_bf16(x, kh, kw, stride, padding, k_pad, m_pad):
    n, c, h, w = x.shape
    oh = (h + 2 * padding - kh) // stride + 1
    ow = (w + 2 * padding - kw) // stride + 1
    xp = jnp.pad(x, ((0, 0), (0, 0), (padding, padding), (padding, padding)))
    patches = []
    for i in range(kh):
        for j in range(kw):
            patches.append(
                xp[:, :, i:i + stride * oh:stride, j:j + stride * ow:stride])
    p = jnp.stack(patches, axis=0)                 # (KH*KW, N, C, OH, OW)
    p = jnp.transpose(p, (2, 0, 1, 3, 4))          # (C, KH*KW, N, OH, OW)
    xcol_t = p.reshape(c * kh * kw, n * oh * ow).astype(jnp.bfloat16)
    return jnp.pad(xcol_t,
                   ((0, k_pad - c * kh * kw), (0, m_pad - n * oh * ow)))


# -----------------------------------------------------------------------------
# Module forward.
# -----------------------------------------------------------------------------
def bn_conv2d_leaky_forward(x, conv_w, gamma, beta, *, stride=1, padding=0,
                            tm=512, eps=1e-5, slope=0.01):
    # TODO(synk): dilation != 1 and groups != 1 (module options) are not implemented;
    # the im2col patch extraction is still formed by XLA (for production shapes an
    # in-kernel gather via Element/scalar-prefetch index maps would avoid the
    # KH*KW-times im2col blow-up in HBM).
    n, c, h, w = x.shape
    oc, c_w, kh, kw = conv_w.shape
    assert c == c_w, "groups != 1 not supported"
    oh = (h + 2 * padding - kh) // stride + 1
    ow = (w + 2 * padding - kw) // stride + 1
    m = n * oh * ow                       # matmul rows -> lane axis
    k = c * kh * kw                       # contraction dim

    oc_pad = _round_up(oc, 8)             # OC on sublanes: pad to 8, not 128
    k_pad = _round_up(k, 128)             # clean MXU contraction

    # Lane-axis row tile: multiple of 128; shrink only enough to keep >= 2 grid
    # steps (pipelines the x_col DMA under the matmul) whenever m allows.
    tm = _round_up(max(128, tm), 128)
    half = max(1, (-(-m // 128)) // 2) * 128
    tm = max(128, min(tm, half))
    m_pad = _round_up(m, tm)
    num_tiles = m_pad // tm

    # VMEM footprint of the fused kernel (resident z + double-buffered x tile).
    fused_vmem = (oc_pad * m_pad * 4            # resident output z
                  + 2 * k_pad * tm * 2          # double-buffered x_col tile (bf16)
                  + 2 * oc_pad * k_pad * 2      # weights (double-buffered)
                  + 2 * oc_pad * 128 * 4        # stats scratch
                  + 4 * oc_pad * 4)             # gamma / beta
    if fused_vmem > 24 * 2 ** 20:
        # TODO(synk): two-pass fallback (conv+stats writing bf16 y, then a parallel
        # normalize pass) for activations too large to keep VMEM-resident.
        raise NotImplementedError(
            "conv output too large for the fused VMEM-resident kernel")

    x_col_t = _im2col_T_bf16(x, kh, kw, stride, padding, k_pad, m_pad)
    w_mat = jnp.pad(conv_w.reshape(oc, k).astype(jnp.bfloat16),
                    ((0, oc_pad - oc), (0, k_pad - k)))
    gamma_p = jnp.pad(gamma.astype(jnp.float32), (0, oc_pad - oc)).reshape(oc_pad, 1)
    beta_p = jnp.pad(beta.astype(jnp.float32), (0, oc_pad - oc)).reshape(oc_pad, 1)

    flops = 2 * oc_pad * k_pad * m_pad + 12 * oc_pad * m_pad
    bytes_accessed = (x_col_t.size * 2 + w_mat.size * 2
                      + oc_pad * m_pad * 4 + 8 * oc_pad)

    z3 = pl.pallas_call(
        functools.partial(_fused_conv_bn_leaky_kernel, tm=tm,
                          num_tiles=num_tiles, m_true=m, eps=eps, slope=slope),
        out_shape=jax.ShapeDtypeStruct((num_tiles, oc_pad, tm), jnp.float32),
        grid_spec=pltpu.PrefetchScalarGridSpec(
            num_scalar_prefetch=0,
            grid=(num_tiles,),
            in_specs=[
                pl.BlockSpec((oc_pad, k_pad), lambda i: (0, 0)),   # W
                pl.BlockSpec((k_pad, tm), lambda i: (0, i)),       # im2col(x)^T tile
                pl.BlockSpec((oc_pad, 1), lambda i: (0, 0)),       # gamma
                pl.BlockSpec((oc_pad, 1), lambda i: (0, 0)),       # beta
            ],
            out_specs=pl.BlockSpec((num_tiles, oc_pad, tm),
                                   lambda i: (0, 0, 0)),           # VMEM-resident
            scratch_shapes=[pltpu.VMEM((oc_pad, 128), jnp.float32),
                            pltpu.VMEM((oc_pad, 128), jnp.float32)]),
        compiler_params=pltpu.CompilerParams(
            dimension_semantics=("arbitrary",),   # carried output + stats
            vmem_limit_bytes=int(min(64 * 2 ** 20,
                                     max(8 * 2 ** 20, 2 * fused_vmem)))),
        cost_estimate=pl.CostEstimate(flops=flops, transcendentals=2 * oc_pad,
                                      bytes_accessed=bytes_accessed),
    )(w_mat, x_col_t, gamma_p, beta_p)

    # (T, OC_pad, tm) -> (OC_pad, M_pad) -> (N, OC, OH, OW)
    z = jnp.transpose(z3, (1, 0, 2)).reshape(oc_pad, m_pad)[:oc, :m]
    z = z.reshape(oc, n, oh, ow)
    return jnp.transpose(z, (1, 0, 2, 3))


# -----------------------------------------------------------------------------
# Reference with matching numerics (bf16 conv operands, f32 accumulation/BN).
# -----------------------------------------------------------------------------
def reference_forward(x, conv_w, gamma, beta, *, stride=1, padding=0,
                      eps=1e-5, slope=0.01):
    y = jax.lax.conv_general_dilated(
        x.astype(jnp.bfloat16), conv_w.astype(jnp.bfloat16),
        window_strides=(stride, stride),
        padding=[(padding, padding), (padding, padding)],
        dimension_numbers=("NCHW", "OIHW", "NCHW"),
        preferred_element_type=jnp.float32)
    mean = jnp.mean(y, axis=(0, 2, 3), keepdims=True)
    var = jnp.var(y, axis=(0, 2, 3), keepdims=True)   # biased, like PyTorch BN
    y_hat = (y - mean) * jax.lax.rsqrt(var + eps)
    z = y_hat * gamma.reshape(1, -1, 1, 1) + beta.reshape(1, -1, 1, 1)
    return jnp.where(z >= 0, z, slope * z)


if __name__ == "__main__":
    # BN_Conv2d_Leaky(in_channels=4, out_channels=8, kernel_size=3,
    #                 stride=1, padding=1, bias=False)
    N, C, H, W = 2, 4, 16, 16
    OC, KH, KW = 8, 3, 3
    stride, padding = 1, 1

    key = jax.random.PRNGKey(0)
    kx, kw_, kg, kb = jax.random.split(key, 4)
    x = jax.random.normal(kx, (N, C, H, W), dtype=jnp.float32)
    conv_w = jax.random.normal(kw_, (OC, C, KH, KW), dtype=jnp.float32) * 0.1
    gamma = 1.0 + 0.1 * jax.random.normal(kg, (OC,), dtype=jnp.float32)
    beta = 0.1 * jax.random.normal(kb, (OC,), dtype=jnp.float32)

    fwd = jax.jit(functools.partial(bn_conv2d_leaky_forward,
                                    stride=stride, padding=padding))
    out = jax.block_until_ready(fwd(x, conv_w, gamma, beta))

    ref = reference_forward(x, conv_w, gamma, beta,
                            stride=stride, padding=padding)
    assert out.shape == (N, OC, H, W)
    assert jnp.allclose(out, ref, atol=2e-3, rtol=2e-3), "mismatch vs reference"

    print("KERNEL_OK")
</pallas_src>

<mosaic_0001>
module attributes {stable_mosaic.version = 11 : i64} {
  func.func @_fused_conv_bn_leaky_kernel(%arg0: i32, %arg1: memref<8x128xbf16, #tpu.memory_space<vmem>>, %arg2: memref<128x256xbf16, #tpu.memory_space<vmem>>, %arg3: memref<8x1xf32, #tpu.memory_space<vmem>>, %arg4: memref<8x1xf32, #tpu.memory_space<vmem>>, %arg5: memref<2x8x256xf32, #tpu.memory_space<vmem>>, %arg6: memref<8x128xf32, #tpu.memory_space<vmem>>, %arg7: memref<8x128xf32, #tpu.memory_space<vmem>>) attributes {dimension_semantics = [#tpu.dimension_semantics<arbitrary>], iteration_bounds = array<i64: 2>, scalar_prefetch = 0 : i64, scratch_operands = 2 : i64, tpu.core_type = #tpu.core_type<tc>, window_params = [{pipeline_mode = #tpu.pipeline_mode<synchronous>, transform_indices = @transform_0, window_bounds = array<i64: 8, 128>}, {transform_indices = @transform_1, window_bounds = array<i64: 128, 256>}, {pipeline_mode = #tpu.pipeline_mode<synchronous>, transform_indices = @transform_2, window_bounds = array<i64: 8, 1>}, {pipeline_mode = #tpu.pipeline_mode<synchronous>, transform_indices = @transform_3, window_bounds = array<i64: 8, 1>}, {pipeline_mode = #tpu.pipeline_mode<synchronous>, transform_indices = @transform_4, window_bounds = array<i64: 2, 8, 256>}]} {
    %c0_i32 = arith.constant 0 : i32
    %0 = arith.cmpi eq, %arg0, %c0_i32 : i32
    %1 = arith.extui %0 : i1 to i32
    %c0_i32_0 = arith.constant 0 : i32
    %2 = arith.cmpi ne, %1, %c0_i32_0 : i32
    scf.if %2 {
      %cst_15 = arith.constant 0.000000e+00 : f32
      %21 = vector.broadcast %cst_15 : f32 to vector<8x128xf32>
      %c0_16 = arith.constant 0 : index
      %c0_17 = arith.constant 0 : index
      %22 = vector.load %arg6[%c0_16, %c0_17] : memref<8x128xf32, #tpu.memory_space<vmem>>, vector<8x128xf32>
      tpu.vector_store %arg6[%c0_16, %c0_17], %21 {strides = array<i32>} : memref<8x128xf32, #tpu.memory_space<vmem>>, vector<8x128xf32>,
    } else {
    }
    %c0 = arith.constant 0 : index
    %c0_1 = arith.constant 0 : index
    %3 = vector.load %arg1[%c0, %c0_1] : memref<8x128xbf16, #tpu.memory_space<vmem>>, vector<8x128xbf16>
    %c0_2 = arith.constant 0 : index
    %c0_3 = arith.constant 0 : index
    %4 = vector.load %arg2[%c0_2, %c0_3] : memref<128x256xbf16, #tpu.memory_space<vmem>>, vector<128x256xbf16>
    %cst = arith.constant dense<0.000000e+00> : vector<8x256xf32>
    %5 = tpu.matmul %3, %4, %cst {dimension_numbers = #tpu.dot_dimension_numbers<[1], [0], [0], [1], [0, 0, 1, 1], [], []>} : vector<8x128xbf16>, vector<128x256xbf16>, vector<8x256xf32> -> vector<8x256xf32>
    %6 = arith.index_cast %arg0 : i32 to index
    %c0_4 = arith.constant 0 : index
    %c0_5 = arith.constant 0 : index
    %7 = vector.load %arg5[%6, %c0_4, %c0_5] : memref<2x8x256xf32, #tpu.memory_space<vmem>>, vector<1x8x256xf32>
    %8 = vector.shape_cast %7 : vector<1x8x256xf32> to vector<8x256xf32>
    %9 = vector.shape_cast %5 : vector<8x256xf32> to vector<1x8x256xf32>
    tpu.vector_store %arg5[%6, %c0_4, %c0_5], %9 {strides = array<i32>} : memref<2x8x256xf32, #tpu.memory_space<vmem>>, vector<1x8x256xf32>,
    %c0_6 = arith.constant 0 : index
    %c0_7 = arith.constant 0 : index
    %10 = vector.load %arg6[%c0_6, %c0_7] : memref<8x128xf32, #tpu.memory_space<vmem>>, vector<8x128xf32>
    %11 = vector.extract_strided_slice %5 {offsets = [0, 0], sizes = [8, 128], strides = [1, 1]} : vector<8x256xf32> to vector<8x128xf32>
    %12 = arith.addf %10, %11 : vector<8x128xf32>
    %c0_8 = arith.constant 0 : index
    %c0_9 = arith.constant 0 : index
    %13 = vector.load %arg6[%c0_8, %c0_9] : memref<8x128xf32, #tpu.memory_space<vmem>>, vector<8x128xf32>
    tpu.vector_store %arg6[%c0_8, %c0_9], %12 {strides = array<i32>} : memref<8x128xf32, #tpu.memory_space<vmem>>, vector<8x128xf32>,
    %c0_10 = arith.constant 0 : index
    %c0_11 = arith.constant 0 : index
    %14 = vector.load %arg6[%c0_10, %c0_11] : memref<8x128xf32, #tpu.memory_space<vmem>>, vector<8x128xf32>
    %15 = vector.extract_strided_slice %5 {offsets = [0, 128], sizes = [8, 128], strides = [1, 1]} : vector<8x256xf32> to vector<8x128xf32>
    %16 = arith.addf %14, %15 : vector<8x128xf32>
    %c0_12 = arith.constant 0 : index
    %c0_13 = arith.constant 0 : index
    %17 = vector.load %arg6[%c0_12, %c0_13] : memref<8x128xf32, #tpu.memory_space<vmem>>, vector<8x128xf32>
    tpu.vector_store %arg6[%c0_12, %c0_13], %16 {strides = array<i32>} : memref<8x128xf32, #tpu.memory_space<vmem>>, vector<8x128xf32>,
    %c1_i32 = arith.constant 1 : i32
    %18 = arith.cmpi eq, %arg0, %c1_i32 : i32
    %19 = arith.extui %18 : i1 to i32
    %c0_i32_14 = arith.constant 0 : i32
    %20 = arith.cmpi ne, %19, %c0_i32_14 : i32
    scf.if %20 {
      %c0_15 = arith.constant 0 : index
      %c0_16 = arith.constant 0 : index
      %21 = vector.load %arg6[%c0_15, %c0_16] : memref<8x128xf32, #tpu.memory_space<vmem>>, vector<8x128xf32>
      %cst_17 = arith.constant dense<0.000000e+00> : vector<8xf32>
      %22 = vector.multi_reduction <add>, %21, %cst_17 [1] : vector<8x128xf32> to vector<8xf32>
      %23 = vector.shape_cast %22 : vector<8xf32> to vector<8x1xf32>
      %cst_18 = arith.constant 0.001953125 : f32
      %24 = vector.broadcast %cst_18 : f32 to vector<8x1xf32>
      %25 = arith.mulf %23, %24 : vector<8x1xf32>
      %cst_19 = arith.constant 0.000000e+00 : f32
      %26 = vector.broadcast %cst_19 : f32 to vector<8x128xf32>
      %c0_20 = arith.constant 0 : index
      %c0_21 = arith.constant 0 : index
      %27 = vector.load %arg7[%c0_20, %c0_21] : memref<8x128xf32, #tpu.memory_space<vmem>>, vector<8x128xf32>
      tpu.vector_store %arg7[%c0_20, %c0_21], %26 {strides = array<i32>} : memref<8x128xf32, #tpu.memory_space<vmem>>, vector<8x128xf32>,
      %28 = tpu.iota {dimensions = array<i32: 1>} : vector<8x256xi32>
      %c0_i32_22 = arith.constant 0 : i32
      %c2_i32 = arith.constant 2 : i32
      %29 = arith.addi %c0_i32_22, %c2_i32 : i32
      %c1_i32_23 = arith.constant 1 : i32
      scf.for %arg8 = %c0_i32_22 to %29 step %c1_i32_23  : i32 {
        %c1_i32_38 = arith.constant 1 : i32
        %44 = arith.muli %arg8, %c1_i32_38 : i32
        %c0_i32_39 = arith.constant 0 : i32
        %45 = arith.addi %c0_i32_39, %44 : i32
        %46 = arith.index_cast %45 : i32 to index
        %c0_40 = arith.constant 0 : index
        %c0_41 = arith.constant 0 : index
        %47 = vector.load %arg5[%46, %c0_40, %c0_41] : memref<2x8x256xf32, #tpu.memory_space<vmem>>, vector<1x8x256xf32>
        %48 = vector.shape_cast %47 : vector<1x8x256xf32> to vector<8x256xf32>
        %c256_i32 = arith.constant 256 : i32
        %49 = arith.muli %45, %c256_i32 : i32
        %50 = vector.broadcast %49 : i32 to vector<8x256xi32>
        %51 = arith.addi %28, %50 : vector<8x256xi32>
        %c512_i32 = arith.constant 512 : i32
        %52 = vector.broadcast %c512_i32 : i32 to vector<8x256xi32>
        %53 = arith.cmpi slt, %51, %52 : vector<8x256xi32>
        %54 = vector.broadcast %25 : vector<8x1xf32> to vector<8x256xf32>
        %55 = arith.subf %48, %54 : vector<8x256xf32>
        %cst_42 = arith.constant 0.000000e+00 : f32
        %56 = vector.broadcast %cst_42 : f32 to vector<8x256xf32>
        %57 = arith.select %53, %55, %56 : vector<8x256xi1>, vector<8x256xf32>
        %58 = vector.extract_strided_slice %57 {offsets = [0, 0], sizes = [8, 128], strides = [1, 1]} : vector<8x256xf32> to vector<8x128xf32>
        %c0_43 = arith.constant 0 : index
        %c0_44 = arith.constant 0 : index
        %59 = vector.load %arg7[%c0_43, %c0_44] : memref<8x128xf32, #tpu.memory_space<vmem>>, vector<8x128xf32>
        %60 = arith.mulf %58, %58 : vector<8x128xf32>
        %61 = arith.addf %59, %60 : vector<8x128xf32>
        %c0_45 = arith.constant 0 : index
        %c0_46 = arith.constant 0 : index
        %62 = vector.load %arg7[%c0_45, %c0_46] : memref<8x128xf32, #tpu.memory_space<vmem>>, vector<8x128xf32>
        tpu.vector_store %arg7[%c0_45, %c0_46], %61 {strides = array<i32>} : memref<8x128xf32, #tpu.memory_space<vmem>>, vector<8x128xf32>,
        %63 = vector.extract_strided_slice %57 {offsets = [0, 128], sizes = [8, 128], strides = [1, 1]} : vector<8x256xf32> to vector<8x128xf32>
        %c0_47 = arith.constant 0 : index
        %c0_48 = arith.constant 0 : index
        %64 = vector.load %arg7[%c0_47, %c0_48] : memref<8x128xf32, #tpu.memory_space<vmem>>, vector<8x128xf32>
        %65 = arith.mulf %63, %63 : vector<8x128xf32>
        %66 = arith.addf %64, %65 : vector<8x128xf32>
        %c0_49 = arith.constant 0 : index
        %c0_50 = arith.constant 0 : index
        %67 = vector.load %arg7[%c0_49, %c0_50] : memref<8x128xf32, #tpu.memory_space<vmem>>, vector<8x128xf32>
        tpu.vector_store %arg7[%c0_49, %c0_50], %66 {strides = array<i32>} : memref<8x128xf32, #tpu.memory_space<vmem>>, vector<8x128xf32>,
      }
      %c2_i32_24 = arith.constant 2 : i32
      %c0_25 = arith.constant 0 : index
      %c0_26 = arith.constant 0 : index
      %30 = vector.load %arg7[%c0_25, %c0_26] : memref<8x128xf32, #tpu.memory_space<vmem>>, vector<8x128xf32>
      %cst_27 = arith.constant dense<0.000000e+00> : vector<8xf32>
      %31 = vector.multi_reduction <add>, %30, %cst_27 [1] : vector<8x128xf32> to vector<8xf32>
      %32 = vector.shape_cast %31 : vector<8xf32> to vector<8x1xf32>
      %cst_28 = arith.constant 0.001953125 : f32
      %33 = vector.broadcast %cst_28 : f32 to vector<8x1xf32>
      %34 = arith.mulf %32, %33 : vector<8x1xf32>
      %cst_29 = arith.constant 9.99999974E-6 : f32
      %35 = vector.broadcast %cst_29 : f32 to vector<8x1xf32>
      %36 = arith.addf %34, %35 : vector<8x1xf32>
      %37 = math.rsqrt %36 : vector<8x1xf32>
      %c0_30 = arith.constant 0 : index
      %c0_31 = arith.constant 0 : index
      %38 = vector.load %arg3[%c0_30, %c0_31] : memref<8x1xf32, #tpu.memory_space<vmem>>, vector<8x1xf32>
      %39 = arith.mulf %38, %37 : vector<8x1xf32>
      %c0_32 = arith.constant 0 : index
      %c0_33 = arith.constant 0 : index
      %40 = vector.load %arg4[%c0_32, %c0_33] : memref<8x1xf32, #tpu.memory_space<vmem>>, vector<8x1xf32>
      %41 = arith.mulf %25, %39 : vector<8x1xf32>
      %42 = arith.subf %40, %41 : vector<8x1xf32>
      %c0_i32_34 = arith.constant 0 : i32
      %c2_i32_35 = arith.constant 2 : i32
      %43 = arith.addi %c0_i32_34, %c2_i32_35 : i32
      %c1_i32_36 = arith.constant 1 : i32
      scf.for %arg8 = %c0_i32_34 to %43 step %c1_i32_36  : i32 {
        %c1_i32_38 = arith.constant 1 : i32
        %44 = arith.muli %arg8, %c1_i32_38 : i32
        %c0_i32_39 = arith.constant 0 : i32
        %45 = arith.addi %c0_i32_39, %44 : i32
        %46 = arith.index_cast %45 : i32 to index
        %c0_40 = arith.constant 0 : index
        %c0_41 = arith.constant 0 : index
        %47 = vector.load %arg5[%46, %c0_40, %c0_41] : memref<2x8x256xf32, #tpu.memory_space<vmem>>, vector<1x8x256xf32>
        %48 = vector.shape_cast %47 : vector<1x8x256xf32> to vector<8x256xf32>
        %49 = vector.broadcast %39 : vector<8x1xf32> to vector<8x256xf32>
        %50 = arith.mulf %48, %49 : vector<8x256xf32>
        %51 = vector.broadcast %42 : vector<8x1xf32> to vector<8x256xf32>
        %52 = arith.addf %50, %51 : vector<8x256xf32>
        %cst_42 = arith.constant 0.000000e+00 : f32
        %53 = vector.broadcast %cst_42 : f32 to vector<8x256xf32>
        %54 = arith.cmpf oge, %52, %53 : vector<8x256xf32>
        %cst_43 = arith.constant 0.00999999977 : f32
        %55 = vector.broadcast %cst_43 : f32 to vector<8x256xf32>
        %56 = arith.mulf %55, %52 : vector<8x256xf32>
        %57 = arith.select %54, %52, %56 : vector<8x256xi1>, vector<8x256xf32>
        %58 = arith.index_cast %45 : i32 to index
        %c0_44 = arith.constant 0 : index
        %c0_45 = arith.constant 0 : index
        %59 = vector.load %arg5[%58, %c0_44, %c0_45] : memref<2x8x256xf32, #tpu.memory_space<vmem>>, vector<1x8x256xf32>
        %60 = vector.shape_cast %59 : vector<1x8x256xf32> to vector<8x256xf32>
        %61 = vector.shape_cast %57 : vector<8x256xf32> to vector<1x8x256xf32>
        tpu.vector_store %arg5[%58, %c0_44, %c0_45], %61 {strides = array<i32>} : memref<2x8x256xf32, #tpu.memory_space<vmem>>, vector<1x8x256xf32>,
      }
      %c2_i32_37 = arith.constant 2 : i32
    } else {
    }
    return
  }
  func.func @transform_0(%arg0: i32) -> (i32, i32) {
    %c0_i32 = arith.constant 0 : i32
    %c0_i32_0 = arith.constant 0 : i32
    %c0_i32_1 = arith.constant 0 : i32
    return %c0_i32, %c0_i32_0 : i32, i32
  }
  func.func @transform_1(%arg0: i32) -> (i32, i32) {
    %c0_i32 = arith.constant 0 : i32
    %c0_i32_0 = arith.constant 0 : i32
    return %c0_i32, %arg0 : i32, i32
  }
  func.func @transform_2(%arg0: i32) -> (i32, i32) {
    %c0_i32 = arith.constant 0 : i32
    %c0_i32_0 = arith.constant 0 : i32
    %c0_i32_1 = arith.constant 0 : i32
    return %c0_i32, %c0_i32_0 : i32, i32
  }
  func.func @transform_3(%arg0: i32) -> (i32, i32) {
    %c0_i32 = arith.constant 0 : i32
    %c0_i32_0 = arith.constant 0 : i32
    %c0_i32_1 = arith.constant 0 : i32
    return %c0_i32, %c0_i32_0 : i32, i32
  }
  func.func @transform_4(%arg0: i32) -> (i32, i32, i32) {
    %c0_i32 = arith.constant 0 : i32
    %c0_i32_0 = arith.constant 0 : i32
    %c0_i32_1 = arith.constant 0 : i32
    %c0_i32_2 = arith.constant 0 : i32
    return %c0_i32, %c0_i32_0, %c0_i32_1 : i32, i32, i32
  }
}

</mosaic_0001>

<llo_original>
// kernel: bn_conv2d_leaky_forward.1
$region0: #{bn_conv2d_leaky_forward.1}
  #allocation0 [shape = 'u32[]', space=smem, size = 0x4, offset = 0x4, fixed_abs, tag = 'smem constant byte address 0x4 - core index']
  #allocation1 [shape = 'u32[144,128]{1,0:T(1,128)}', space=vmem, size = 0x12000, scoped, tag = 'internal scratch']
  #allocation2 [shape = 'f32[8,128]{1,0:T(8,128)}', space=vmem, size = 0x1000, scoped, tag = 'scratch operand']
  #allocation3 [shape = 'f32[8,128]{1,0:T(8,128)}', space=vmem, size = 0x1000, scoped, tag = 'scratch operand']
  %s0 = inlined_call_operand.vmem [shape: bf16[8,128], index: 0, kind: input, shape index: {}]
  %s1 = inlined_call_operand.vmem [shape: bf16[128,512], index: 1, kind: input, shape index: {}]
  %s2 = inlined_call_operand.vmem [shape: f32[8,1], index: 2, kind: input, shape index: {}]
  %s3 = inlined_call_operand.vmem [shape: f32[8,1], index: 3, kind: input, shape index: {}]
  %s4 = inlined_call_operand.vmem [shape: f32[2,8,256], index: 4, kind: output, shape index: {}]
  %s5 = sld [smem:[#allocation0]]
  $region109: #{bn_conv2d_leaky_forward.1} parent=0
    _
  %s7 = ssub.s32 1, %s5
  %s8 = scalar_select 0, %s7, %s5
  $region1: #{bn_conv2d_leaky_forward.1} parent=0
    #allocation4 [shape = 'u8[131072]{0}', space=vmem, size = 0x20000, scoped, tag = 'input window, operand 1']
    loop: start=0, step=1, limit=4
    $region2: #{bn_conv2d_leaky_forward.1} parent=1 // loop_pre_header
      _
    $region3: #{bn_conv2d_leaky_forward.1} parent=1 // loop_header
      %s10 = sphi 0, %s14
      %p11 = scmp.ge.s32.totalorder %s10, 4
      %s18 = sphi 0, %s18
      %s20 = sphi 0, %s18
      %s21 = sphi 0, %s20
      %s35 = sphi 0, %s21
      %s41 = sphi 0, %s43
      %s44 = sphi 0, %s41
      %s45 = sphi 0, %s44
      %s61 = sphi 0, %s45
      %s65 = sphi 0, %s65
      %s67 = sphi 0, %s65
      %s68 = sphi 0, %s67
      %s82 = sphi 0, %s68
      %s86 = sphi 0, %s86
      %s88 = sphi 0, %s86
      %s89 = sphi 0, %s88
      %s103 = sphi 0, %s89
      %s107 = sphi 0, %s107
      %s109 = sphi 0, %s107
      %s110 = sphi 0, %s109
      %s124 = sphi 0, %s110
    $region4: #{bn_conv2d_leaky_forward.1} parent=1 // loop_header_branch
      %13 = sbr.rel (%p11) target = $region8
    $region5: #{bn_conv2d_leaky_forward.1} parent=1 // loop_body
      %s15 = ssub.s32 %s10, 1
      %s16 = ssub.s32 %s10, 2
      %s17 = sadd.s32 %s10, 1
      %s19 = sadd.s32 %s18, 1
      %p22 = scmp.eq.s32.totalorder %s10, 1
      %p23 = scmp.ne.s32.totalorder %s18, %s20
      %p24 = scmp.eq.s32.totalorder %s10, 0
      %p25 = por %p23, %p24
      %p26 = scmp.ne.s32.totalorder %s18, %s20
      %p27 = scmp.eq.s32.totalorder %s15, 1
      %p28 = por %p26, %p27
      %p29 = scmp.ne.s32.totalorder %s20, %s21
      %p30 = scmp.eq.s32.totalorder %s15, 0
      %p31 = por %p29, %p30
      %p32 = scmp.ne.s32.totalorder %s20, %s21
      %p33 = scmp.eq.s32.totalorder %s16, 1
      %p34 = por %p32, %p33
      %p36 = scmp.ne.s32.totalorder %s21, %s35
      %p37 = scmp.eq.s32.totalorder %s16, 0
      %p38 = por %p36, %p37
      %s39 = ssub.s32 %s10, %s17
      %p40 = scmp.eq.s32.totalorder %s39, 0
      %s42 = sadd.s32 %s41, 1
      %s43 = scalar_select %p40, %s41, %s42
      %p46 = pneg %p40
      %p47 = scmp.eq.s32.totalorder %s10, 1
      %p48 = por %p46, %p47
      %p49 = scmp.ne.s32.totalorder %s41, %s44
      %p50 = scmp.eq.s32.totalorder %s10, 0
      %p51 = por %p49, %p50
      %p52 = scmp.ne.s32.totalorder %s41, %s44
      %p53 = scmp.eq.s32.totalorder %s15, 1
      %p54 = por %p52, %p53
      %p55 = scmp.ne.s32.totalorder %s44, %s45
      %p56 = scmp.eq.s32.totalorder %s15, 0
      %p57 = por %p55, %p56
      %p58 = scmp.ne.s32.totalorder %s44, %s45
      %p59 = scmp.eq.s32.totalorder %s16, 1
      %p60 = por %p58, %p59
      %p62 = scmp.ne.s32.totalorder %s45, %s61
      %p63 = scmp.eq.s32.totalorder %s16, 0
      %p64 = por %p62, %p63
      %s66 = sadd.s32 %s65, 1
      %p69 = scmp.eq.s32.totalorder %s10, 1
      %p70 = scmp.ne.s32.totalorder %s65, %s67
      %p71 = scmp.eq.s32.totalorder %s10, 0
      %p72 = por %p70, %p71
      %p73 = scmp.ne.s32.totalorder %s65, %s67
      %p74 = scmp.eq.s32.totalorder %s15, 1
      %p75 = por %p73, %p74
      %p76 = scmp.ne.s32.totalorder %s67, %s68
      %p77 = scmp.eq.s32.totalorder %s15, 0
      %p78 = por %p76, %p77
      %p79 = scmp.ne.s32.totalorder %s67, %s68
      %p80 = scmp.eq.s32.totalorder %s16, 1
      %p81 = por %p79, %p80
      %p83 = scmp.ne.s32.totalorder %s68, %s82
      %p84 = scmp.eq.s32.totalorder %s16, 0
      %p85 = por %p83, %p84
      %s87 = sadd.s32 %s86, 1
      %p90 = scmp.eq.s32.totalorder %s10, 1
      %p91 = scmp.ne.s32.totalorder %s86, %s88
      %p92 = scmp.eq.s32.totalorder %s10, 0
      %p93 = por %p91, %p92
      %p94 = scmp.ne.s32.totalorder %s86, %s88
      %p95 = scmp.eq.s32.totalorder %s15, 1
      %p96 = por %p94, %p95
      %p97 = scmp.ne.s32.totalorder %s88, %s89
      %p98 = scmp.eq.s32.totalorder %s15, 0
      %p99 = por %p97, %p98
      %p100 = scmp.ne.s32.totalorder %s88, %s89
      %p101 = scmp.eq.s32.totalorder %s16, 1
      %p102 = por %p100, %p101
      %p104 = scmp.ne.s32.totalorder %s89, %s103
      %p105 = scmp.eq.s32.totalorder %s16, 0
      %p106 = por %p104, %p105
      %s108 = sadd.s32 %s107, 1
      %p111 = scmp.eq.s32.totalorder %s10, 1
      %p112 = scmp.ne.s32.totalorder %s107, %s109
      %p113 = scmp.eq.s32.totalorder %s10, 0
      %p114 = por %p112, %p113
      %p115 = scmp.ne.s32.totalorder %s107, %s109
      %p116 = scmp.eq.s32.totalorder %s15, 1
      %p117 = por %p115, %p116
      %p118 = scmp.ne.s32.totalorder %s109, %s110
      %p119 = scmp.eq.s32.totalorder %s15, 0
      %p120 = por %p118, %p119
      %p121 = scmp.ne.s32.totalorder %s109, %s110
      %p122 = scmp.eq.s32.totalorder %s16, 1
      %p123 = por %p121, %p122
      %p125 = scmp.ne.s32.totalorder %s110, %s124
      %p126 = scmp.eq.s32.totalorder %s16, 0
      %p127 = por %p125, %p126
      %p128 = scmp.le.s32.totalorder 1, %s10
      %p129 = scmp.lt.s32.totalorder %s10, 3
      %p130 = pnand %p128, %p129
      %p131 = pneg %p130
      // Predicated region
      $region9: #{bn_conv2d_leaky_forward.1} parent=5 // pred_check
        _
      $region10: #{bn_conv2d_leaky_forward.1} parent=5 // pred_check_branch
        %133 = sbr.rel (%p130) target = $region12
      $region11: #{bn_conv2d_leaky_forward.1} parent=5 // pred_region
        %s134 = ssub.s32 %s10, 1
        // Predicated region
        $region13: #{bn_conv2d_leaky_forward.1} parent=11 // pred_check
          %p135 = pneg %p31
        $region14: #{bn_conv2d_leaky_forward.1} parent=11 // pred_check_branch
          %137 = sbr.rel (%p135) target = $region16
        $region15: #{bn_conv2d_leaky_forward.1} parent=11 // pred_region
          _
        $region16: #{bn_conv2d_leaky_forward.1} parent=11 // pred_fallthru
          _
        // Predicated region
        $region17: #{bn_conv2d_leaky_forward.1} parent=11 // pred_check
          %p138 = pneg %p78
        $region18: #{bn_conv2d_leaky_forward.1} parent=11 // pred_check_branch
          %140 = sbr.rel (%p138) target = $region20
        $region19: #{bn_conv2d_leaky_forward.1} parent=11 // pred_region
          _
        $region20: #{bn_conv2d_leaky_forward.1} parent=11 // pred_fallthru
          _
        // Predicated region
        $region21: #{bn_conv2d_leaky_forward.1} parent=11 // pred_check
          %p141 = pneg %p99
        $region22: #{bn_conv2d_leaky_forward.1} parent=11 // pred_check_branch
          %143 = sbr.rel (%p141) target = $region24
        $region23: #{bn_conv2d_leaky_forward.1} parent=11 // pred_region
          _
        $region24: #{bn_conv2d_leaky_forward.1} parent=11 // pred_fallthru
          _
      $region12: #{bn_conv2d_leaky_forward.1} parent=5 // pred_fallthru
        _
      %p144 = scmp.lt.s32.totalorder %s10, 2
      // Predicated region
      $region25: #{bn_conv2d_leaky_forward.1} parent=5 // pred_check
        %p145 = pneg %p144
      $region26: #{bn_conv2d_leaky_forward.1} parent=5 // pred_check_branch
        %147 = sbr.rel (%p145) target = $region28
      $region27: #{bn_conv2d_leaky_forward.1} parent=5 // pred_region
        // Predicated region
        $region29: #{bn_conv2d_leaky_forward.1} parent=27 // pred_check
          %p148 = pneg %p51
        $region30: #{bn_conv2d_leaky_forward.1} parent=27 // pred_check_branch
          %150 = sbr.rel (%p148) target = $region32
        $region31: #{bn_conv2d_leaky_forward.1} parent=27 // pred_region
          %s151 = sand.u32 %s41, 1
          %s152 = sand.u32 %s41, 1
          %s153 = smul.addr %s152, 128
          %s154 = scalar_lea.vmem [#allocation4], %s153
          %s155 = smul.u32 2, %s10
          %s156 = smul.addr %s155, 4
          %s157 = scalar_lea.vmem %s1, %s156
          // Predicated region
          $region33: #{bn_conv2d_leaky_forward.1} parent=31 // pred_check
            _
          $region34: #{bn_conv2d_leaky_forward.1} parent=31 // pred_check_branch
            %159 = sbr.rel (0) target = $region36
          $region35: #{bn_conv2d_leaky_forward.1} parent=31 // pred_region
            // Predicated region
            $region37: #{bn_conv2d_leaky_forward.1} parent=35 // pred_check
              _
            $region38: #{bn_conv2d_leaky_forward.1} parent=35 // pred_check_branch
              %161 = sbr.rel (0) target = $region40
            $region39: #{bn_conv2d_leaky_forward.1} parent=35 // pred_region
              // Predicated region
              $region52: #{bn_conv2d_leaky_forward.1} parent=39 // pred_check
                _
              $region53: #{bn_conv2d_leaky_forward.1} parent=39 // pred_check_branch
                %207 = sbr.rel (0) target = $region55
              $region54: #{bn_conv2d_leaky_forward.1} parent=39 // pred_region
                loop: start=0, step=1, limit=1
                $region56: #{bn_conv2d_leaky_forward.1} parent=54 // loop_pre_header
                  _
                $region57: #{bn_conv2d_leaky_forward.1} parent=54 // loop_header
                  %s209 = sphi 0, %s213
                  %p210 = scmp.ge.s32.totalorder %s209, 1
                  %s214 = sphi %s157, %s157
                  %s215 = sphi %s154, %s154
                $region58: #{bn_conv2d_leaky_forward.1} parent=54 // loop_header_branch
                  %212 = sbr.rel (%p210) target = $region62
                $region59: #{bn_conv2d_leaky_forward.1} parent=54 // loop_body
                  %v216 = vld [vmem:[%s214] sm:$0xff]
                  %217 = vst [vmem:[%s215] sm:$0xff] %v216
                  %v218 = vld [vmem:[%s214 + $0x10] sm:$0xff]
                  %219 = vst [vmem:[%s215 + $0x8] sm:$0xff] %v218
                  %v220 = vld [vmem:[%s214 + $0x20] sm:$0xff]
                  %221 = vst [vmem:[%s215 + $0x10] sm:$0xff] %v220
                  %v222 = vld [vmem:[%s214 + $0x30] sm:$0xff]
                  %223 = vst [vmem:[%s215 + $0x18] sm:$0xff] %v222
                  %v224 = vld [vmem:[%s214 + $0x40] sm:$0xff]
                  %225 = vst [vmem:[%s215 + $0x20] sm:$0xff] %v224
                  %v226 = vld [vmem:[%s214 + $0x50] sm:$0xff]
                  %227 = vst [vmem:[%s215 + $0x28] sm:$0xff] %v226
                  %v228 = vld [vmem:[%s214 + $0x60] sm:$0xff]
                  %229 = vst [vmem:[%s215 + $0x30] sm:$0xff] %v228
                  %v230 = vld [vmem:[%s214 + $0x70] sm:$0xff]
                  %231 = vst [vmem:[%s215 + $0x38] sm:$0xff] %v230
                  %v232 = vld [vmem:[%s214 + $0x80] sm:$0xff]
                  %233 = vst [vmem:[%s215 + $0x40] sm:$0xff] %v232
                  %v234 = vld [vmem:[%s214 + $0x90] sm:$0xff]
                  %235 = vst [vmem:[%s215 + $0x48] sm:$0xff] %v234
                  %v236 = vld [vmem:[%s214 + $0xa0] sm:$0xff]
                  %237 = vst [vmem:[%s215 + $0x50] sm:$0xff] %v236
                  %v238 = vld [vmem:[%s214 + $0xb0] sm:$0xff]
                  %239 = vst [vmem:[%s215 + $0x58] sm:$0xff] %v238
                  %v240 = vld [vmem:[%s214 + $0xc0] sm:$0xff]
                  %241 = vst [vmem:[%s215 + $0x60] sm:$0xff] %v240
                  %v242 = vld [vmem:[%s214 + $0xd0] sm:$0xff]
                  %243 = vst [vmem:[%s215 + $0x68] sm:$0xff] %v242
                  %v244 = vld [vmem:[%s214 + $0xe0] sm:$0xff]
                  %245 = vst [vmem:[%s215 + $0x70] sm:$0xff] %v244
                  %v246 = vld [vmem:[%s214 + $0xf0] sm:$0xff]
                  %247 = vst [vmem:[%s215 + $0x78] sm:$0xff] %v246
                $region60: #{bn_conv2d_leaky_forward.1} parent=54 // loop_footer
                  %s213 = sadd.s32 1, %s209
                $region61: #{bn_conv2d_leaky_forward.1} parent=54 // loop_footer_branch
                  %208 = sbr.rel target = $region57
                $region62: #{bn_conv2d_leaky_forward.1} parent=54 // loop_exit
                  _
              $region55: #{bn_conv2d_leaky_forward.1} parent=39 // pred_fallthru
                _
              // Predicated region
              $region63: #{bn_conv2d_leaky_forward.1} parent=39 // pred_check
                _
              $region64: #{bn_conv2d_leaky_forward.1} parent=39 // pred_check_branch
                %249 = sbr.rel target = $region66
              $region65: #{bn_conv2d_leaky_forward.1} parent=39 // pred_region
                _
              $region66: #{bn_conv2d_leaky_forward.1} parent=39 // pred_fallthru
                _
            $region40: #{bn_conv2d_leaky_forward.1} parent=35 // pred_fallthru
              _
            // Predicated region
            $region41: #{bn_conv2d_leaky_forward.1} parent=35 // pred_check
              _
            $region42: #{bn_conv2d_leaky_forward.1} parent=35 // pred_check_branch
              %163 = sbr.rel target = $region44
            $region43: #{bn_conv2d_leaky_forward.1} parent=35 // pred_region
              %s165 = ssub.s32 256, 1
              loop: start=0, step=1, limit=1
              $region45: #{bn_conv2d_leaky_forward.1} parent=43 // loop_pre_header
                _
              $region46: #{bn_conv2d_leaky_forward.1} parent=43 // loop_header
                %s167 = sphi 0, %s171
                %p168 = scmp.ge.s32.totalorder %s167, 1
                %s172 = sphi %s157, %s157
                %s173 = sphi %s154, %s154
              $region47: #{bn_conv2d_leaky_forward.1} parent=43 // loop_header_branch
                %170 = sbr.rel (%p168) target = $region51
              $region48: #{bn_conv2d_leaky_forward.1} parent=43 // loop_body
                %v174 = vld [vmem:[%s172] sm:%s165]
                %175 = vst [vmem:[%s173] sm:%s165] %v174
                %v176 = vld [vmem:[%s172 + $0x10] sm:%s165]
                %177 = vst [vmem:[%s173 + $0x8] sm:%s165] %v176
                %v178 = vld [vmem:[%s172 + $0x20] sm:%s165]
                %179 = vst [vmem:[%s173 + $0x10] sm:%s165] %v178
                %v180 = vld [vmem:[%s172 + $0x30] sm:%s165]
                %181 = vst [vmem:[%s173 + $0x18] sm:%s165] %v180
                %v182 = vld [vmem:[%s172 + $0x40] sm:%s165]
                %183 = vst [vmem:[%s173 + $0x20] sm:%s165] %v182
                %v184 = vld [vmem:[%s172 + $0x50] sm:%s165]
                %185 = vst [vmem:[%s173 + $0x28] sm:%s165] %v184
                %v186 = vld [vmem:[%s172 + $0x60] sm:%s165]
                %187 = vst [vmem:[%s173 + $0x30] sm:%s165] %v186
                %v188 = vld [vmem:[%s172 + $0x70] sm:%s165]
                %189 = vst [vmem:[%s173 + $0x38] sm:%s165] %v188
                %v190 = vld [vmem:[%s172 + $0x80] sm:%s165]
                %191 = vst [vmem:[%s173 + $0x40] sm:%s165] %v190
                %v192 = vld [vmem:[%s172 + $0x90] sm:%s165]
                %193 = vst [vmem:[%s173 + $0x48] sm:%s165] %v192
                %v194 = vld [vmem:[%s172 + $0xa0] sm:%s165]
                %195 = vst [vmem:[%s173 + $0x50] sm:%s165] %v194
                %v196 = vld [vmem:[%s172 + $0xb0] sm:%s165]
                %197 = vst [vmem:[%s173 + $0x58] sm:%s165] %v196
                %v198 = vld [vmem:[%s172 + $0xc0] sm:%s165]
                %199 = vst [vmem:[%s173 + $0x60] sm:%s165] %v198
                %v200 = vld [vmem:[%s172 + $0xd0] sm:%s165]
                %201 = vst [vmem:[%s173 + $0x68] sm:%s165] %v200
                %v202 = vld [vmem:[%s172 + $0xe0] sm:%s165]
                %203 = vst [vmem:[%s173 + $0x70] sm:%s165] %v202
                %v204 = vld [vmem:[%s172 + $0xf0] sm:%s165]
                %205 = vst [vmem:[%s173 + $0x78] sm:%s165] %v204
              $region49: #{bn_conv2d_leaky_forward.1} parent=43 // loop_footer
                %s171 = sadd.s32 1, %s167
              $region50: #{bn_conv2d_leaky_forward.1} parent=43 // loop_footer_branch
                %166 = sbr.rel target = $region46
              $region51: #{bn_conv2d_leaky_forward.1} parent=43 // loop_exit
                _
            $region44: #{bn_conv2d_leaky_forward.1} parent=35 // pred_fallthru
              _
          $region36: #{bn_conv2d_leaky_forward.1} parent=31 // pred_fallthru
            _
          %250 = vnop
        $region32: #{bn_conv2d_leaky_forward.1} parent=27 // pred_fallthru
          _
      $region28: #{bn_conv2d_leaky_forward.1} parent=5 // pred_fallthru
        _
      %p251 = scmp.le.s32.totalorder 1, %s10
      %p252 = scmp.lt.s32.totalorder %s10, 3
      %p253 = pnand %p251, %p252
      %p254 = pneg %p253
      // Predicated region
      $region67: #{bn_conv2d_leaky_forward.1} parent=5 // pred_check
        _
      $region68: #{bn_conv2d_leaky_forward.1} parent=5 // pred_check_branch
        %256 = sbr.rel (%p253) target = $region70
      $region69: #{bn_conv2d_leaky_forward.1} parent=5 // pred_region
        %s257 = ssub.s32 %s10, 1
        %s258 = sand.u32 %s44, 1
        %s259 = sand.u32 %s44, 1
        %s260 = smul.addr %s259, 128
        %s261 = scalar_lea.vmem [#allocation4], %s260
        // Predicated region
        $region71: #{bn_conv2d_leaky_forward.1} parent=69 // pred_check
          %p262 = pneg %p57
        $region72: #{bn_conv2d_leaky_forward.1} parent=69 // pred_check_branch
          %264 = sbr.rel (%p262) target = $region74
        $region73: #{bn_conv2d_leaky_forward.1} parent=69 // pred_region
          _
        $region74: #{bn_conv2d_leaky_forward.1} parent=69 // pred_fallthru
          _
        %p265 = pneg %p31
        %p266 = pneg %p28
        %s267 = sand.u32 %s44, 1
        %s268 = sand.u32 %s44, 1
        %s269 = smul.addr %s268, 128
        %s270 = scalar_lea.vmem [#allocation4], %s269
        %p271 = pneg %p57
        %p272 = pneg %p54
        %p273 = pneg %p78
        %p274 = pneg %p75
        %p275 = pneg %p99
        %p276 = pneg %p96
        %p277 = pneg %p120
        %p278 = pneg %p117
        %s279 = smul.u32 2, %s15
        %p281 = scmp.eq.s32.totalorder %s15, 0
        // Predicated region
        $region75: #{bn_conv2d_leaky_forward.1} parent=69 // pred_check
          %p282 = pneg %p281
        $region76: #{bn_conv2d_leaky_forward.1} parent=69 // pred_check_branch
          %284 = sbr.rel (%p282) target = $region78
        $region77: #{bn_conv2d_leaky_forward.1} parent=69 // pred_region
          %285 = vst [vmem:[#allocation2] sm:$0xff] 0.0
        $region78: #{bn_conv2d_leaky_forward.1} parent=69 // pred_fallthru
          _
        %v286 = vld [vmem:[%s0] sm:$0xf]
        %v287 = vld [vmem:[%s261] sm:$0xff]
        %v288 = vld [vmem:[%s261 + $0x8] sm:$0xff]
        %v289 = vld [vmem:[%s261 + $0x10] sm:$0xff]
        %v290 = vld [vmem:[%s261 + $0x18] sm:$0xff]
        %v291 = vld [vmem:[%s261 + $0x20] sm:$0xff]
        %v292 = vld [vmem:[%s261 + $0x28] sm:$0xff]
        %v293 = vld [vmem:[%s261 + $0x30] sm:$0xff]
        %v294 = vld [vmem:[%s261 + $0x38] sm:$0xff]
        %v295 = vld [vmem:[%s261 + $0x40] sm:$0xff]
        %v296 = vld [vmem:[%s261 + $0x48] sm:$0xff]
        %v297 = vld [vmem:[%s261 + $0x50] sm:$0xff]
        %v298 = vld [vmem:[%s261 + $0x58] sm:$0xff]
        %v299 = vld [vmem:[%s261 + $0x60] sm:$0xff]
        %v300 = vld [vmem:[%s261 + $0x68] sm:$0xff]
        %v301 = vld [vmem:[%s261 + $0x70] sm:$0xff]
        %v302 = vld [vmem:[%s261 + $0x78] sm:$0xff]
        %v319 = vunpack.c.l.b16 %v287
        %v320 = vunpack.c.h.b16 %v287
        %v321 = vunpack.c.l.b16 %v288
        %v322 = vunpack.c.h.b16 %v288
        %v323 = vunpack.c.l.b16 %v289
        %v324 = vunpack.c.h.b16 %v289
        %v325 = vunpack.c.l.b16 %v290
        %v326 = vunpack.c.h.b16 %v290
        %v327 = vunpack.c.l.b16 %v291
        %v328 = vunpack.c.h.b16 %v291
        %v329 = vunpack.c.l.b16 %v292
        %v330 = vunpack.c.h.b16 %v292
        %v331 = vunpack.c.l.b16 %v293
        %v332 = vunpack.c.h.b16 %v293
        %v333 = vunpack.c.l.b16 %v294
        %v334 = vunpack.c.h.b16 %v294
        %v335 = vunpack.c.l.b16 %v295
        %v336 = vunpack.c.h.b16 %v295
        %v337 = vunpack.c.l.b16 %v296
        %v338 = vunpack.c.h.b16 %v296
        %v339 = vunpack.c.l.b16 %v297
        %v340 = vunpack.c.h.b16 %v297
        %v341 = vunpack.c.l.b16 %v298
        %v342 = vunpack.c.h.b16 %v298
        %v343 = vunpack.c.l.b16 %v299
        %v344 = vunpack.c.h.b16 %v299
        %v345 = vunpack.c.l.b16 %v300
        %v346 = vunpack.c.h.b16 %v300
        %v347 = vunpack.c.l.b16 %v301
        %v348 = vunpack.c.h.b16 %v301
        %v349 = vunpack.c.l.b16 %v302
        %v350 = vunpack.c.h.b16 %v302
        %v351 = vpack.c.b16 %v321, %v319
        %v352 = vpack.c.b16 %v322, %v320
        %v353 = vpack.c.b16 %v325, %v323
        %v354 = vpack.c.b16 %v326, %v324
        %v355 = vpack.c.b16 %v329, %v327
        %v356 = vpack.c.b16 %v330, %v328
        %v357 = vpack.c.b16 %v333, %v331
        %v358 = vpack.c.b16 %v334, %v332
        %v359 = vpack.c.b16 %v337, %v335
        %v360 = vpack.c.b16 %v338, %v336
        %v361 = vpack.c.b16 %v341, %v339
        %v362 = vpack.c.b16 %v342, %v340
        %v363 = vpack.c.b16 %v345, %v343
        %v364 = vpack.c.b16 %v346, %v344
        %v365 = vpack.c.b16 %v349, %v347
        %v366 = vpack.c.b16 %v350, %v348
        %383 = vmatprep.subr.bf16.mxu0 %v366
        %384 = vmatpush1.bf16.msra.mxu0 %v365
        %385 = vmatprep.subr.bf16.mxu0 %v364
        %386 = vmatpush1.bf16.msra.mxu0 %v363
        %387 = vmatprep.subr.bf16.mxu0 %v362
        %388 = vmatpush1.bf16.msra.mxu0 %v361
        %389 = vmatprep.subr.bf16.mxu0 %v360
        %390 = vmatpush1.bf16.msra.mxu0 %v359
        %391 = vmatprep.subr.bf16.mxu0 %v358
        %392 = vmatpush1.bf16.msra.mxu0 %v357
        %393 = vmatprep.subr.bf16.mxu0 %v356
        %394 = vmatpush1.bf16.msra.mxu0 %v355
        %395 = vmatprep.subr.bf16.mxu0 %v354
        %396 = vmatpush1.bf16.msra.mxu0 %v353
        %397 = vmatprep.subr.bf16.mxu0 %v352
        %398 = vmatpush1.bf16.msra.mxu0 %v351
        %399 = vmatprep.subr.bf16.mxu0 0
        %400 = vmatpush2.bf16.msra.mxu0 0
        %401 = vmatprep.subr.bf16.mxu0 0
        %402 = vmatpush2.bf16.msra.mxu0 0
        %403 = vmatprep.subr.bf16.mxu0 0
        %404 = vmatpush2.bf16.msra.mxu0 0
        %405 = vmatprep.subr.bf16.mxu0 0
        %406 = vmatpush2.bf16.msra.mxu0 0
        %407 = vmatprep.subr.bf16.mxu0 0
        %408 = vmatpush2.bf16.msra.mxu0 0
        %409 = vmatprep.subr.bf16.mxu0 0
        %410 = vmatpush2.bf16.msra.mxu0 0
        %411 = vmatprep.subr.bf16.mxu0 0
        %412 = vmatpush2.bf16.msra.mxu0 0
        %413 = vmatprep.subr.bf16.mxu0 0
        %414 = vmatpush2.bf16.msra.mxu0 0
        %415 = vmatprep.mubr.bf16.mxu0 0
        %416 = vmatmul.mubr.bf16.gmra.mxu0 %v286
        %v417 = vpop.f32.mrf.mxu0
        %v418 = vadd.f32 0.0, %v417
        %v419 = vpop.f32.mrf.mxu0
        %v420 = vadd.f32 0.0, %v419
        %v421 = vpop.f32.mrf.mxu0
        %v422 = vpop.f32.mrf.mxu0
        %423 = vdwg.mxu0
        %s424 = smul.u32 %s15, 2
        %s425 = smul.addr %s424, 8
        %s426 = scalar_lea.vmem %s4, %s425
        %427 = vst [vmem:[%s426] sm:$0xff] %v418
        %428 = vst [vmem:[%s426 + $0x8] sm:$0xff] %v420
        %v429 = vld [vmem:[#allocation2] sm:$0xff]
        %v430 = vadd.f32 %v429, %v418
        %431 = vst [vmem:[#allocation2] sm:$0xff] %v430
        %v432 = vld [vmem:[#allocation2] sm:$0xff]
        %v433 = vadd.f32 %v432, %v420
        %434 = vst [vmem:[#allocation2] sm:$0xff] %v433
        %p435 = scmp.eq.s32.totalorder %s15, 1
        // Predicated region
        $region79: #{bn_conv2d_leaky_forward.1} parent=69 // pred_check
          %p436 = pneg %p435
        $region80: #{bn_conv2d_leaky_forward.1} parent=69 // pred_check_branch
          %438 = sbr.rel (%p436) target = $region82
        $region81: #{bn_conv2d_leaky_forward.1} parent=69 // pred_region
          %v439 = vld [vmem:[#allocation2] sm:$0xff]
          %440 = vadd.xlane.f32.xlu0 %v439
          %v441 = vpop.xlane.xlu0 %440
          %v442 = vmul.f32 %v441, 0.001953125
          %443 = vst [vmem:[#allocation3] sm:$0xff] 0.0
          %v444 = vlaneseq
          %v445 = vand.u32 %v444, 127
          %v446 = vadd.s32 %v445, 128
          loop: start=0, step=1, limit=2
          $region83: #{bn_conv2d_leaky_forward.1} parent=81 // loop_pre_header
            _
          $region84: #{bn_conv2d_leaky_forward.1} parent=81 // loop_header
            %s448 = sphi 0, %s452
            %p449 = scmp.ge.s32.totalorder %s448, 2
          $region85: #{bn_conv2d_leaky_forward.1} parent=81 // loop_header_branch
            %451 = sbr.rel (%p449) target = $region89
          $region86: #{bn_conv2d_leaky_forward.1} parent=81 // loop_body
            %s453 = smul.u32 %s448, 2
            %s454 = smul.addr %s453, 8
            %s455 = scalar_lea.vmem %s4, %s454
            %v456 = vld [vmem:[%s455] sm:$0xff]
            %v457 = vld [vmem:[%s455 + $0x8] sm:$0xff]
            %s458 = smul.u32 %s448, 256
            %v459 = vstv %s458
            %v460 = vadd.s32 %v445, %v459
            %v461 = vadd.s32 %v446, %v459
            %vm462 = vcmp.lt.s32.totalorder %v460, 512
            %vm463 = vcmp.lt.s32.totalorder %v461, 512
            %v464 = vsub.f32 %v456, %v442
            %v465 = vsub.f32 %v457, %v442
            %v466 = vsel %vm462, %v464, 0.0
            %v467 = vsel %vm463, %v465, 0.0
            %v468 = vld [vmem:[#allocation3] sm:$0xff]
            %v469 = vmul.f32 %v466, %v466
            %v470 = vadd.f32 %v468, %v469
            %471 = vst [vmem:[#allocation3] sm:$0xff] %v470
            %v472 = vld [vmem:[#allocation3] sm:$0xff]
            %v473 = vmul.f32 %v467, %v467
            %v474 = vadd.f32 %v472, %v473
            %475 = vst [vmem:[#allocation3] sm:$0xff] %v474
          $region87: #{bn_conv2d_leaky_forward.1} parent=81 // loop_footer
            %s452 = sadd.s32 1, %s448
          $region88: #{bn_conv2d_leaky_forward.1} parent=81 // loop_footer_branch
            %447 = sbr.rel target = $region84
          $region89: #{bn_conv2d_leaky_forward.1} parent=81 // loop_exit
            _
          %v476 = vld [vmem:[#allocation3] sm:$0xff]
          %477 = vadd.xlane.f32.xlu0 %v476
          %v478 = vpop.xlane.xlu0 %477
          %v479 = vmul.f32 %v478, 0.001953125
          %v480 = vadd.f32 %v479, 1e-05
          %v481 = vrsqrt.pop %v480
          %v482 = vld [vmem:[%s2] sm:$0xff]
          %v483 = vmul.f32 %v482, %v481
          %v484 = vld [vmem:[%s3] sm:$0xff]
          %v485 = vmul.f32 %v442, %v483
          %v486 = vsub.f32 %v484, %v485
          loop: start=0, step=1, limit=2
          $region90: #{bn_conv2d_leaky_forward.1} parent=81 // loop_pre_header
            _
          $region91: #{bn_conv2d_leaky_forward.1} parent=81 // loop_header
            %s488 = sphi 0, %s492
            %p489 = scmp.ge.s32.totalorder %s488, 2
          $region92: #{bn_conv2d_leaky_forward.1} parent=81 // loop_header_branch
            %491 = sbr.rel (%p489) target = $region96
          $region93: #{bn_conv2d_leaky_forward.1} parent=81 // loop_body
            %s493 = smul.u32 %s488, 2
            %s494 = smul.addr %s493, 8
            %s495 = scalar_lea.vmem %s4, %s494
            %v496 = vld [vmem:[%s495] sm:$0xff]
            %v497 = vld [vmem:[%s495 + $0x8] sm:$0xff]
            %499 = vset.pattern.permute.xlu0 0
            %500 = vperm.xlu0 %499, %v483
            %v501 = vpop.permute.xlu0 %500
            %v503 = vmul.f32 %v496, %v501
            %v504 = vmul.f32 %v497, %v501
            %506 = vset.pattern.permute.xlu0 0
            %507 = vperm.xlu0 %506, %v486
            %v508 = vpop.permute.xlu0 %507
            %v510 = vadd.f32 %v503, %v508
            %v511 = vadd.f32 %v504, %v508
            %vm512 = vcmp.ge.f32.partialorder %v510, 0.0
            %vm513 = vcmp.ge.f32.partialorder %v511, 0.0
            %v514 = vmul.f32 %v510, 0.01
            %v515 = vmul.f32 %v511, 0.01
            %v516 = vsel %vm512, %v510, %v514
            %v517 = vsel %vm513, %v511, %v515
            %518 = vst [vmem:[%s495] sm:$0xff] %v516
            %519 = vst [vmem:[%s495 + $0x8] sm:$0xff] %v517
          $region94: #{bn_conv2d_leaky_forward.1} parent=81 // loop_footer
            %s492 = sadd.s32 1, %s488
          $region95: #{bn_conv2d_leaky_forward.1} parent=81 // loop_footer_branch
            %487 = sbr.rel target = $region91
          $region96: #{bn_conv2d_leaky_forward.1} parent=81 // loop_exit
            _
        $region82: #{bn_conv2d_leaky_forward.1} parent=69 // pred_fallthru
          _
        // Predicated region
        $region97: #{bn_conv2d_leaky_forward.1} parent=69 // pred_check
          %p520 = pneg %p117
        $region98: #{bn_conv2d_leaky_forward.1} parent=69 // pred_check_branch
          %522 = sbr.rel (%p520) target = $region100
        $region99: #{bn_conv2d_leaky_forward.1} parent=69 // pred_region
          _
        $region100: #{bn_conv2d_leaky_forward.1} parent=69 // pred_fallthru
          _
        // Predicated region
        $region101: #{bn_conv2d_leaky_forward.1} parent=69 // pred_check
          %p523 = pneg %p117
        $region102: #{bn_conv2d_leaky_forward.1} parent=69 // pred_check_branch
          %525 = sbr.rel (%p523) target = $region104
        $region103: #{bn_conv2d_leaky_forward.1} parent=69 // pred_region
          _
        $region104: #{bn_conv2d_leaky_forward.1} parent=69 // pred_fallthru
          _
      $region70: #{bn_conv2d_leaky_forward.1} parent=5 // pred_fallthru
        _
      %p526 = scmp.le.s32.totalorder 2, %s10
      // Predicated region
      $region105: #{bn_conv2d_leaky_forward.1} parent=5 // pred_check
        %p527 = pneg %p526
      $region106: #{bn_conv2d_leaky_forward.1} parent=5 // pred_check_branch
        %529 = sbr.rel (%p527) target = $region108
      $region107: #{bn_conv2d_leaky_forward.1} parent=5 // pred_region
        %s530 = ssub.s32 %s10, 2
      $region108: #{bn_conv2d_leaky_forward.1} parent=5 // pred_fallthru
        _
    $region6: #{bn_conv2d_leaky_forward.1} parent=1 // loop_footer
      %s14 = sadd.s32 1, %s10
    $region7: #{bn_conv2d_leaky_forward.1} parent=1 // loop_footer_branch
      %9 = sbr.rel target = $region3
    $region8: #{bn_conv2d_leaky_forward.1} parent=1 // loop_exit
      _

</llo_original>
